<compile_context>
chip_gen: v7x
topology: tpu7x:2x2x1
jax: 0.10.0
libtpu: 0.0.40
codegen_flags: <defaults>
</compile_context>

<pallas_src>
import functools

import jax
import jax.numpy as jnp
from jax import lax
from jax.experimental import pallas as pl
from jax.experimental.pallas import tpu as pltpu


def _cdiv(a: int, b: int) -> int:
    return -(-a // b)


# ---------------------------------------------------------------------------
# Kernel 1: classifier  y = x @ W^T + b   (nn.Linear(hidden_size, 2))
# Computed transposed: logits_t[2, TB] = W[2, H] . X[TB, H]^T (contract H, lane-dense out).
# ---------------------------------------------------------------------------
def _classifier_kernel(x_ref, w_ref, b_ref, o_ref):
    # x_ref: [TB, H], w_ref: [2, H], b_ref: [2, 1], o_ref: [2, TB]
    logits_t = lax.dot_general(
        w_ref[...], x_ref[...],
        dimension_numbers=(((1,), (1,)), ((), ())),   # contract H on both operands
        preferred_element_type=jnp.float32)
    o_ref[...] = logits_t + b_ref[...]                # bias broadcast along lane axis


def classifier_forward(x, weight, bias, *, max_batch_tile=2048):
    B, H = x.shape
    N = weight.shape[0]                               # = 2
    itemsize = jnp.dtype(x.dtype).itemsize

    # Adaptive tile: keep 2 (double-buffer) * tb * H * itemsize under ~8 MiB so the
    # kernel fits v5e's 16 MiB scoped-VMEM default as well as v6e/v7x.
    budget = 8 * 1024 * 1024
    tb_cap = max(128, (budget // max(1, 2 * H * itemsize)) // 128 * 128)
    tb = min(max_batch_tile, tb_cap)
    if B <= tb:
        tb = B                                        # single full block, no tiling
    grid = (_cdiv(B, tb),)                            # ragged tail: Pallas partial block

    out_t = pl.pallas_call(
        _classifier_kernel,
        out_shape=jax.ShapeDtypeStruct((N, B), jnp.float32),
        grid=grid,
        in_specs=[
            pl.BlockSpec((tb, H), lambda i: (i, 0)),
            pl.BlockSpec((N, H), lambda i: (0, 0)),
            pl.BlockSpec((N, 1), lambda i: (0, 0)),
        ],
        out_specs=pl.BlockSpec((N, tb), lambda i: (0, i)),
        compiler_params=pltpu.CompilerParams(dimension_semantics=("parallel",)),
    )(x, weight.astype(x.dtype), bias.reshape(N, 1).astype(jnp.float32))
    return out_t.T                                    # one small transpose outside


# ---------------------------------------------------------------------------
# Kernel 2: negative-sampling distribution  Pn(w) = U(w)^p / sum(U(w)^p)
# ---------------------------------------------------------------------------
_LANE = 128
_SUBLANE = 8
_ROW_TILE = 2048            # 2048 x 128 f32 = 1 MiB per streamed block
_FUSED_MAX_BYTES = 4 << 20  # whole-vocab-resident path: <=4 MiB per buffer


def _pow_p(u, pow_value):
    if pow_value == 0.75:
        s = jnp.sqrt(u)
        return s * jnp.sqrt(s)                        # u^(3/4) without exp/log chain
    return jnp.power(u, jnp.float32(pow_value))       # static exponent


def _fused_prob_kernel(u_ref, o_ref, *, pow_value):
    # Whole vocab resident: u^p, exact sum, exact divide, single store.
    up = _pow_p(u_ref[...], pow_value)
    total = jnp.sum(up)                               # zero-padded lanes contribute 0
    o_ref[...] = up * (1.0 / total)                   # exact divide (sum(probs)==1 check)


def _pow_partial_kernel(u_ref, psum_ref, *, pow_value, valid_rows, row_tile):
    # u_ref: [TR, 128]; psum_ref: [1, 1, 128] per-tile per-lane partial sums.
    i = pl.program_id(0)
    up = _pow_p(u_ref[...], pow_value)
    remaining = valid_rows - i * row_tile             # mask garbage rows of the tail tile
    row_ids = lax.broadcasted_iota(jnp.int32, up.shape, 0)
    up = jnp.where(row_ids < remaining, up, 0.0)
    psum_ref[...] = jnp.sum(up, axis=0, keepdims=True).reshape(1, 1, _LANE)


def _scale_recompute_kernel(inv_ref, u_ref, o_ref, *, pow_value):
    # Recompute u^p (2 EUP sqrts, free slot) instead of storing/reloading it from HBM.
    o_ref[...] = _pow_p(u_ref[...], pow_value) * inv_ref[...]


def negative_sampling_prob(unigram_counts, pow_value, *, force_tiled=False,
                           row_tile=_ROW_TILE):
    v = unigram_counts.shape[0]
    u = unigram_counts.astype(jnp.float32)
    v_pad = _cdiv(v, _LANE) * _LANE
    if v_pad != v:
        # TODO(synk): <=127-element zero pad so the vocab folds into a lane-dense
        # (rows, 128) view; 0^p = 0 keeps the sum exact. (Multiple-of-128 vocabs are
        # reshaped for free, no copy.)
        u = jnp.pad(u, (0, v_pad - v))
    rows = v_pad // _LANE
    u2d = u.reshape(rows, _LANE)                      # metadata-only reshape

    if (not force_tiled) and (v_pad * 4 <= _FUSED_MAX_BYTES):
        # Fused single pass: read u once, write probs once (2*V*4 bytes of HBM traffic).
        probs2d = pl.pallas_call(
            functools.partial(_fused_prob_kernel, pow_value=float(pow_value)),
            out_shape=jax.ShapeDtypeStruct((rows, _LANE), jnp.float32),
            grid=(1,),
            in_specs=[pl.BlockSpec((rows, _LANE), lambda i: (0, 0))],
            out_specs=pl.BlockSpec((rows, _LANE), lambda i: (0, 0)),
            compiler_params=pltpu.CompilerParams(vmem_limit_bytes=32 * 1024 * 1024),
        )(u2d)
    else:
        # Tiled fallback: pass 1 = per-tile partial sums ('parallel' grid, shards across
        # v7x's two TCs), tiny XLA reduce + exact reciprocal in the wrapper,
        # pass 2 = recompute u^p and scale (no u_pow intermediate in HBM).
        tr = min(row_tile, rows)
        if tr < rows:
            tr = max(_SUBLANE, (tr // _SUBLANE) * _SUBLANE)
        n_tiles = _cdiv(rows, tr)

        partials = pl.pallas_call(
            functools.partial(_pow_partial_kernel, pow_value=float(pow_value),
                              valid_rows=rows, row_tile=tr),
            out_shape=jax.ShapeDtypeStruct((n_tiles, 1, _LANE), jnp.float32),
            grid=(n_tiles,),
            in_specs=[pl.BlockSpec((tr, _LANE), lambda i: (i, 0))],
            out_specs=pl.BlockSpec((1, 1, _LANE), lambda i: (i, 0, 0)),
            compiler_params=pltpu.CompilerParams(dimension_semantics=("parallel",)),
        )(u2d)

        inv_total = (1.0 / jnp.sum(partials, dtype=jnp.float32)).reshape(1, 1)

        probs2d = pl.pallas_call(
            functools.partial(_scale_recompute_kernel, pow_value=float(pow_value)),
            out_shape=jax.ShapeDtypeStruct((rows, _LANE), jnp.float32),
            grid=(n_tiles,),
            in_specs=[pl.BlockSpec((1, 1), lambda i: (0, 0)),
                      pl.BlockSpec((tr, _LANE), lambda i: (i, 0))],
            out_specs=pl.BlockSpec((tr, _LANE), lambda i: (i, 0)),
            compiler_params=pltpu.CompilerParams(dimension_semantics=("parallel",)),
        )(inv_total, u2d)

    probs = probs2d.reshape(-1)
    return probs if v_pad == v else probs[:v]


# ---------------------------------------------------------------------------
# Small wrapper mirroring the PyTorch module
# ---------------------------------------------------------------------------
class Word2VecPallas:
    def __init__(self, hidden_size, pow_value, key):
        self.hidden_size = hidden_size
        self.pow_value = pow_value
        k_w, k_b = jax.random.split(key)
        bound = 1.0 / (hidden_size ** 0.5)            # nn.Linear default init range
        self.weight = jax.random.uniform(
            k_w, (2, hidden_size), minval=-bound, maxval=bound, dtype=jnp.float32)
        self.bias = jax.random.uniform(
            k_b, (2,), minval=-bound, maxval=bound, dtype=jnp.float32)

    def get_prob_sampling(self, unigram_counts):
        return negative_sampling_prob(unigram_counts, self.pow_value)

    def forward(self, x):
        # TODO(synk): reference forward() is `pass`; we run the defined classifier head.
        return classifier_forward(x, self.weight, self.bias)


if __name__ == "__main__":
    key = jax.random.PRNGKey(0)
    k_model, k_x, k_x2, k_u, k_u2 = jax.random.split(key, 5)

    hidden, batch, vocab, pow_value = 32, 8, 384, 0.75
    model = Word2VecPallas(hidden_size=hidden, pow_value=pow_value, key=k_model)

    # --- classifier head: small single-block path ---
    x = jax.random.normal(k_x, (batch, hidden), dtype=jnp.float32)
    logits = model.forward(x)
    jax.block_until_ready(logits)
    ref_logits = x @ model.weight.T + model.bias
    assert logits.shape == (batch, 2)
    assert jnp.allclose(logits, ref_logits, rtol=1e-4, atol=1e-4)

    # --- classifier head: tiled ragged-batch path (grid=3, partial last block) ---
    batch2 = 300
    x2 = jax.random.normal(k_x2, (batch2, hidden), dtype=jnp.float32)
    logits2 = classifier_forward(x2, model.weight, model.bias, max_batch_tile=128)
    jax.block_until_ready(logits2)
    ref_logits2 = x2 @ model.weight.T + model.bias
    assert logits2.shape == (batch2, 2)
    assert jnp.allclose(logits2, ref_logits2, rtol=1e-4, atol=1e-4)

    # --- neg-sampling distribution: fused whole-vocab-resident path ---
    unigram = jax.random.uniform(k_u, (vocab,), minval=1.0, maxval=100.0,
                                 dtype=jnp.float32)
    probs = model.get_prob_sampling(unigram)
    jax.block_until_ready(probs)
    u_pow_ref = unigram ** 0.75
    ref_probs = u_pow_ref / jnp.sum(u_pow_ref)
    assert probs.shape == (vocab,)
    assert jnp.allclose(probs, ref_probs, rtol=1e-4, atol=1e-6)
    assert abs(float(jnp.sum(probs)) - 1.0) < 1e-4

    # --- neg-sampling: tiled recompute fallback (ragged vocab + masked tail tile) ---
    vocab2 = 1465                                     # pads to 1536 -> 12 rows; tile=8
    unigram2 = jax.random.uniform(k_u2, (vocab2,), minval=1.0, maxval=100.0,
                                  dtype=jnp.float32)
    probs2 = negative_sampling_prob(unigram2, pow_value, force_tiled=True, row_tile=8)
    jax.block_until_ready(probs2)
    u_pow_ref2 = unigram2 ** 0.75
    ref_probs2 = u_pow_ref2 / jnp.sum(u_pow_ref2)
    assert probs2.shape == (vocab2,)
    assert jnp.allclose(probs2, ref_probs2, rtol=1e-4, atol=1e-6)
    assert abs(float(jnp.sum(probs2)) - 1.0) < 1e-4

    print("KERNEL_OK")
</pallas_src>

<mosaic_0001>
module attributes {stable_mosaic.version = 11 : i64} {
  func.func @_classifier_kernel(%arg0: i32, %arg1: memref<8x32xf32, #tpu.memory_space<vmem>>, %arg2: memref<2x32xf32, #tpu.memory_space<vmem>>, %arg3: memref<2x1xf32, #tpu.memory_space<vmem>>, %arg4: memref<2x8xf32, #tpu.memory_space<vmem>>) attributes {dimension_semantics = [#tpu.dimension_semantics<parallel>], iteration_bounds = array<i64: 1>, scalar_prefetch = 0 : i64, scratch_operands = 0 : i64, tpu.core_type = #tpu.core_type<tc>, window_params = [{transform_indices = @transform_0, window_bounds = array<i64: 8, 32>}, {pipeline_mode = #tpu.pipeline_mode<synchronous>, transform_indices = @transform_1, window_bounds = array<i64: 2, 32>}, {pipeline_mode = #tpu.pipeline_mode<synchronous>, transform_indices = @transform_2, window_bounds = array<i64: 2, 1>}, {transform_indices = @transform_3, window_bounds = array<i64: 2, 8>}]} {
    %c0 = arith.constant 0 : index
    %c0_0 = arith.constant 0 : index
    %0 = vector.load %arg2[%c0, %c0_0] : memref<2x32xf32, #tpu.memory_space<vmem>>, vector<2x32xf32>
    %c0_1 = arith.constant 0 : index
    %c0_2 = arith.constant 0 : index
    %1 = vector.load %arg1[%c0_1, %c0_2] : memref<8x32xf32, #tpu.memory_space<vmem>>, vector<8x32xf32>
    %cst = arith.constant dense<0.000000e+00> : vector<2x8xf32>
    %2 = tpu.matmul %0, %1, %cst {dimension_numbers = #tpu.dot_dimension_numbers<[1], [1], [0], [0], [0, 0, 1, 0], [], []>} : vector<2x32xf32>, vector<8x32xf32>, vector<2x8xf32> -> vector<2x8xf32>
    %c0_3 = arith.constant 0 : index
    %c0_4 = arith.constant 0 : index
    %3 = vector.load %arg3[%c0_3, %c0_4] : memref<2x1xf32, #tpu.memory_space<vmem>>, vector<2x1xf32>
    %4 = vector.broadcast %3 : vector<2x1xf32> to vector<2x8xf32>
    %5 = arith.addf %2, %4 : vector<2x8xf32>
    %c0_5 = arith.constant 0 : index
    %c0_6 = arith.constant 0 : index
    %6 = vector.load %arg4[%c0_5, %c0_6] : memref<2x8xf32, #tpu.memory_space<vmem>>, vector<2x8xf32>
    tpu.vector_store %arg4[%c0_5, %c0_6], %5 {strides = array<i32>} : memref<2x8xf32, #tpu.memory_space<vmem>>, vector<2x8xf32>,
    return
  }
  func.func @transform_0(%arg0: i32) -> (i32, i32) {
    %c0_i32 = arith.constant 0 : i32
    %c0_i32_0 = arith.constant 0 : i32
    return %arg0, %c0_i32 : i32, i32
  }
  func.func @transform_1(%arg0: i32) -> (i32, i32) {
    %c0_i32 = arith.constant 0 : i32
    %c0_i32_0 = arith.constant 0 : i32
    %c0_i32_1 = arith.constant 0 : i32
    return %c0_i32, %c0_i32_0 : i32, i32
  }
  func.func @transform_2(%arg0: i32) -> (i32, i32) {
    %c0_i32 = arith.constant 0 : i32
    %c0_i32_0 = arith.constant 0 : i32
    %c0_i32_1 = arith.constant 0 : i32
    return %c0_i32, %c0_i32_0 : i32, i32
  }
  func.func @transform_3(%arg0: i32) -> (i32, i32) {
    %c0_i32 = arith.constant 0 : i32
    %c0_i32_0 = arith.constant 0 : i32
    return %c0_i32, %arg0 : i32, i32
  }
}

</mosaic_0001>

<llo_original>
// kernel: tpu_custom_call.1
$region0: #{tpu_custom_call.1}
  #allocation0 [shape = 'u32[]', space=smem, size = 0x4, offset = 0x4, fixed_abs, tag = 'smem constant byte address 0x4 - core index']
  #allocation1 [shape = 'u32[144,128]{1,0:T(1,128)}', space=vmem, size = 0x12000, scoped, tag = 'internal scratch']
  %s0 = inlined_call_operand.hbm [shape: f32[8,32], index: 0, kind: input, shape index: {}]
  %s1 = inlined_call_operand.vmem [shape: f32[2,32], index: 1, kind: input, shape index: {}]
  %s2 = inlined_call_operand.vmem [shape: f32[2,1], index: 2, kind: input, shape index: {}]
  %s3 = inlined_call_operand.hbm [shape: f32[2,8], index: 3, kind: output, shape index: {}]
  %s4 = sld [smem:[#allocation0]]
  $region26: #{tpu_custom_call.1} parent=0
    _
  %s6 = ssub.s32 1, %s4
  %s7 = scalar_select 0, %s6, %s4
  $region1: #{tpu_custom_call.1} parent=0
    #allocation2 [shape = 'u8[4096]{0}', space=vmem, size = 0x1000, scoped, tag = 'input window, operand 0, single buffered']
    #allocation3 [shape = 's32[1]{0}', space=sflag, size = 0x4, scoped, tag = 'scoped memory for tpu_custom_call.1']
    #allocation4 [shape = 's32[1]{0}', space=sflag, size = 0x4, scoped, tag = 'scoped memory for tpu_custom_call.1']
    #allocation5 [shape = 'u8[1024]{0}', space=vmem, size = 0x400, scoped, tag = 'output window, operand 0, single buffered']
    %8 = vsyncpa [#allocation3], 0
    %9 = vsyncpa [#allocation4], 0
    // Predicated region
    $region2: #{tpu_custom_call.1} parent=1 // pred_check
      _
    $region3: #{tpu_custom_call.1} parent=1 // pred_check_branch
      %11 = sbr.rel (0) target = $region5
    $region4: #{tpu_custom_call.1} parent=1 // pred_region
      %s13 = ssub.s32 128, 128
      %14 = vsyncadd [#allocation3], %s13
      %s16 = sshll.u32 [#allocation2], 4
      %s17 = int_to_ptr.vmem [resolvable:$true] %s16
      %19 = dma.hbm_to_vmem [thread:$0]  %s0, 128, %s17, [#allocation3]
    $region5: #{tpu_custom_call.1} parent=1 // pred_fallthru
      _
    // Predicated region
    $region6: #{tpu_custom_call.1} parent=1 // pred_check
      _
    $region7: #{tpu_custom_call.1} parent=1 // pred_check_branch
      %21 = sbr.rel (0) target = $region9
    $region8: #{tpu_custom_call.1} parent=1 // pred_region
      _
    $region9: #{tpu_custom_call.1} parent=1 // pred_fallthru
      _
    // Predicated region
    $region10: #{tpu_custom_call.1} parent=1 // pred_check
      _
    $region11: #{tpu_custom_call.1} parent=1 // pred_check_branch
      %23 = sbr.rel (0) target = $region13
    $region12: #{tpu_custom_call.1} parent=1 // pred_region
      _
    $region13: #{tpu_custom_call.1} parent=1 // pred_fallthru
      _
    // Predicated region
    $region14: #{tpu_custom_call.1} parent=1 // pred_check
      _
    $region15: #{tpu_custom_call.1} parent=1 // pred_check_branch
      %25 = sbr.rel (0) target = $region17
    $region16: #{tpu_custom_call.1} parent=1 // pred_region
      %26 = dma.done [#allocation3], 128
    $region17: #{tpu_custom_call.1} parent=1 // pred_fallthru
      _
    %v27 = vld [vmem:[%s1] sm:$0x3]
    %v28 = vld [vmem:[#allocation2] sm:$0xff]
    %v29 = vld [vmem:[%s2] sm:$0x3]
    %31 = vset.pattern.permute.xlu0 0
    %32 = vperm.xlu0 %31, %v29
    %v33 = vpop.permute.xlu0 %32
    %vm35 = vcmask 261120
    %v37 = vsel %vm35, %v27, 0
    %v40 = vsel %vm35, %v28, 0
    %42 = vmatprep.subr.mxu0 0.0
    %43 = vmatpush1.xpose.msra.mxu0 %v40
    %44 = vmatprep.subr.mxu0 0.0
    %45 = vmatpush1.xpose.msra.mxu0 0.0
    %46 = vmatprep.subr.mxu0 0.0
    %47 = vmatpush1.xpose.msra.mxu0 0.0
    %48 = vmatprep.subr.mxu0 0.0
    %49 = vmatpush1.xpose.msra.mxu0 0.0
    %50 = vmatprep.subr.mxu0 0.0
    %51 = vmatpush1.xpose.msra.mxu0 0.0
    %52 = vmatprep.subr.mxu0 0.0
    %53 = vmatpush1.xpose.msra.mxu0 0.0
    %54 = vmatprep.subr.mxu0 0.0
    %55 = vmatpush1.xpose.msra.mxu0 0.0
    %56 = vmatprep.subr.mxu0 0.0
    %57 = vmatpush1.xpose.msra.mxu0 0.0
    %58 = vmatprep.subr.mxu0 0.0
    %59 = vmatpush1.xpose.msra.mxu0 0.0
    %60 = vmatprep.subr.mxu0 0.0
    %61 = vmatpush1.xpose.msra.mxu0 0.0
    %62 = vmatprep.subr.mxu0 0.0
    %63 = vmatpush1.xpose.msra.mxu0 0.0
    %64 = vmatprep.subr.mxu0 0.0
    %65 = vmatpush1.xpose.msra.mxu0 0.0
    %66 = vmatprep.subr.mxu0 0.0
    %67 = vmatpush1.xpose.msra.mxu0 0.0
    %68 = vmatprep.subr.mxu0 0.0
    %69 = vmatpush1.xpose.msra.mxu0 0.0
    %70 = vmatprep.subr.mxu0 0.0
    %71 = vmatpush1.xpose.msra.mxu0 0.0
    %72 = vmatprep.subr.mxu0 0.0
    %73 = vmatpush1.xpose.msra.mxu0 0.0
    %74 = vmatprep.subr.mxu0 0.0
    %75 = vmatpush1.xpose.msra.mxu0 0.0
    %76 = vmatprep.subr.mxu0 0.0
    %77 = vmatpush1.xpose.msra.mxu0 0.0
    %78 = vmatprep.subr.mxu0 0.0
    %79 = vmatpush1.xpose.msra.mxu0 0.0
    %80 = vmatprep.subr.mxu0 0.0
    %81 = vmatpush1.xpose.msra.mxu0 0.0
    %82 = vmatprep.subr.mxu0 0.0
    %83 = vmatpush1.xpose.msra.mxu0 0.0
    %84 = vmatprep.subr.mxu0 0.0
    %85 = vmatpush1.xpose.msra.mxu0 0.0
    %86 = vmatprep.subr.mxu0 0.0
    %87 = vmatpush1.xpose.msra.mxu0 0.0
    %88 = vmatprep.subr.mxu0 0.0
    %89 = vmatpush1.xpose.msra.mxu0 0.0
    %90 = vmatprep.subr.mxu0 0.0
    %91 = vmatpush1.xpose.msra.mxu0 0.0
    %92 = vmatprep.subr.mxu0 0.0
    %93 = vmatpush1.xpose.msra.mxu0 0.0
    %94 = vmatprep.subr.mxu0 0.0
    %95 = vmatpush1.xpose.msra.mxu0 0.0
    %96 = vmatprep.subr.mxu0 0.0
    %97 = vmatpush1.xpose.msra.mxu0 0.0
    %98 = vmatprep.subr.mxu0 0.0
    %99 = vmatpush1.xpose.msra.mxu0 0.0
    %100 = vmatprep.subr.mxu0 0.0
    %101 = vmatpush1.xpose.msra.mxu0 0.0
    %102 = vmatprep.subr.mxu0 0.0
    %103 = vmatpush1.xpose.msra.mxu0 0.0
    %104 = vmatprep.subr.mxu0 0.0
    %105 = vmatpush1.xpose.msra.mxu0 0.0
    %106 = vmatprep.mubr.f32.mxu0 0.0
    %107 = vmatmul.mubr.f32.gmra.mrb[0].mxu0 %v37
    %v108 = vpop.f32.mrb[0].mxu0
    %v109 = vadd.f32 %v33, %v108
    %v110 = vpop.f32.mrb[0].mxu0
    %111 = vdwg.mxu0
    %vm112 = vcmask 58368
    %113 = vst.msk [vmem:[#allocation5] sm:$0x3] %vm112, %v109
    // Predicated region
    $region18: #{tpu_custom_call.1} parent=1 // pred_check
      _
    $region19: #{tpu_custom_call.1} parent=1 // pred_check_branch
      %115 = sbr.rel (0) target = $region21
    $region20: #{tpu_custom_call.1} parent=1 // pred_region
      %s117 = ssub.s32 32, 32
      %118 = vsyncadd [#allocation4], %s117
      %s120 = sshll.u32 [#allocation5], 4
      %s121 = int_to_ptr.vmem [resolvable:$true] %s120
      %123 = dma.vmem_to_hbm [thread:$0]  %s121, 32, %s3, [#allocation4]
    $region21: #{tpu_custom_call.1} parent=1 // pred_fallthru
      _
    // Predicated region
    $region22: #{tpu_custom_call.1} parent=1 // pred_check
      _
    $region23: #{tpu_custom_call.1} parent=1 // pred_check_branch
      %125 = sbr.rel (0) target = $region25
    $region24: #{tpu_custom_call.1} parent=1 // pred_region
      %126 = dma.done [#allocation4], 32
    $region25: #{tpu_custom_call.1} parent=1 // pred_fallthru
      _
    %127 = vsyncpa [#allocation3], 1
    %128 = vsyncpa [#allocation4], 1

</llo_original>
